<compile_context>
chip_gen: v7x
topology: tpu7x:2x2x1
jax: 0.10.0
libtpu: 0.0.40
codegen_flags: <defaults>
</compile_context>

<pallas_src>
import functools

import jax
import jax.numpy as jnp
from jax.experimental import pallas as pl
from jax.experimental.pallas import tpu as pltpu

# -------------------- config (mirrors TextCNN __init__) ----------------------
VOCAB = 50
EMB_DIM = 32
FILTERS = (2, 3, 4)
OUT_CHANNELS = 8
NUM_CLASSES = 2
BATCH = 2
SEQ_LEN = 16


# ------------------------------ Pallas kernel --------------------------------
def textcnn_kernel(ids_ref,        # (B*L, 1) int32
                   labels_ref,     # (B, 1)   int32
                   table_ref,      # (V, E)   f32  embedding table
                   wpk_ref,        # (WMAX*E, NF*C) f32  packed conv weights
                   bpk_ref,        # (1, NF*C)      f32  packed conv biases
                   lwt_ref,        # (NF*C, NC)     f32  linear weight (pre-T)
                   lb_ref,         # (1, NC)        f32  linear bias
                   logits_ref,     # out: (B, NC) f32
                   loss_ref):      # out: (1, 1)  f32
    BL = ids_ref.shape[0]
    B = labels_ref.shape[0]
    L = BL // B
    V, E = table_ref.shape
    KE, NFC = wpk_ref.shape
    WMAX = KE // E
    NC = lb_ref.shape[1]
    C = OUT_CHANNELS

    # ---- embedding gather as one-hot @ table (single MXU matmul) ----
    ids = ids_ref[...]                                              # (B*L, 1)
    onehot_ids = (jax.lax.broadcasted_iota(jnp.int32, (BL, V), 1) == ids
                  ).astype(jnp.float32)                             # (B*L, V)
    emb = jnp.dot(onehot_ids, table_ref[...],
                  preferred_element_type=jnp.float32)               # (B*L, E)

    # ---- im2col slab: sublane-shifted copies, concat on lanes -> K = WMAX*E ----
    chunks = [emb]
    for dw in range(1, WMAX):
        shifted = jnp.concatenate(
            [emb[dw:, :], jnp.zeros((dw, E), jnp.float32)], axis=0)
        chunks.append(shifted)
    x = jnp.concatenate(chunks, axis=-1)                            # (B*L, WMAX*E)

    # ---- all conv widths in one matmul (K = 128, N = NF*C) ----
    scores = jnp.dot(x, wpk_ref[...],
                     preferred_element_type=jnp.float32)            # (B*L, NF*C)
    scores = jnp.maximum(scores + bpk_ref[...], 0.0)                # bias + ReLU

    # ---- mask partial-window positions (per filter width), then max-pool ----
    # ReLU output >= 0, so masking invalid positions to 0 never changes the max.
    p_iota = jax.lax.broadcasted_iota(jnp.int32, (L, NFC), 0)
    c_iota = jax.lax.broadcasted_iota(jnp.int32, (L, NFC), 1)
    valid = None
    for f, w in enumerate(FILTERS):
        band = ((c_iota >= f * C) & (c_iota < (f + 1) * C)
                & (p_iota < (L - w + 1)))
        valid = band if valid is None else (valid | band)
    scores3 = scores.reshape(B, L, NFC)                             # (B, L, NF*C)
    masked = jnp.where(valid[None, :, :], scores3, 0.0)
    feat = jnp.max(masked, axis=1)                                  # (B, NF*C)
    # TODO(synk): nn.Dropout is identity at inference; no stochastic mask applied.

    # ---- linear head ----
    logits = jnp.dot(feat, lwt_ref[...],
                     preferred_element_type=jnp.float32) + lb_ref[...]
    logits_ref[...] = logits                                        # (B, NC)

    # ---- CrossEntropyLoss (mean) with in-kernel one-hot labels ----
    onehot_lab = (jax.lax.broadcasted_iota(jnp.int32, (B, NC), 1)
                  == labels_ref[...]).astype(jnp.float32)           # (B, NC)
    m = jnp.max(logits, axis=-1, keepdims=True)
    z = logits - m
    lse = jnp.log(jnp.sum(jnp.exp(z), axis=-1, keepdims=True))
    nll = -jnp.sum(onehot_lab * (z - lse), axis=-1, keepdims=True)  # (B, 1)
    loss_ref[...] = jnp.sum(nll, axis=0, keepdims=True) * (1.0 / B) # (1, 1)


# --------------------------- host-side param packing -------------------------
def pack_params(params):
    """Pre-transpose / pre-reshape weights once, outside the hot path."""
    C = OUT_CHANNELS
    NF = len(FILTERS)
    WMAX = max(FILTERS)
    wpk = jnp.zeros((WMAX * EMB_DIM, NF * C), jnp.float32)
    biases = []
    for f, w in enumerate(FILTERS):
        Wf = params[f'w{w}']                                   # (C, w, E)
        blk = jnp.transpose(Wf, (1, 2, 0)).reshape(w * EMB_DIM, C)
        wpk = wpk.at[:w * EMB_DIM, f * C:(f + 1) * C].set(blk)
        biases.append(params[f'b{w}'])                         # (1, C)
    return {
        'emb_table': params['emb_table'],                      # (V, E)
        'w_conv': wpk,                                         # (WMAX*E, NF*C)
        'b_conv': jnp.concatenate(biases, axis=-1),            # (1, NF*C)
        'lin_wt': params['lin_w'].T,                           # (NF*C, NC)
        'lin_b': params['lin_b'],                              # (1, NC)
    }


# ------------------------------ JAX wrapper ----------------------------------
@functools.partial(jax.jit, static_argnames=())
def textcnn_forward(input_ids, input_labels, packed):
    B, L = input_ids.shape
    ids2d = input_ids.reshape(B * L, 1).astype(jnp.int32)
    labels2d = input_labels.reshape(B, 1).astype(jnp.int32)

    vmem = pl.BlockSpec(memory_space=pltpu.MemorySpace.VMEM)
    logits, loss = pl.pallas_call(
        textcnn_kernel,
        out_shape=(
            jax.ShapeDtypeStruct((B, NUM_CLASSES), jnp.float32),
            jax.ShapeDtypeStruct((1, 1), jnp.float32),
        ),
        in_specs=[vmem] * 7,
        out_specs=(vmem, vmem),
    )(ids2d, labels2d, packed['emb_table'], packed['w_conv'],
      packed['b_conv'], packed['lin_wt'], packed['lin_b'])
    return loss[0, 0], logits


# --------------------------- pure-JAX reference -------------------------------
def textcnn_reference(input_ids, input_labels, params):
    emb = params['emb_table'][input_ids]                      # (B, L, E)
    feats = []
    for W, b in ((params['w2'], params['b2']),
                 (params['w3'], params['b3']),
                 (params['w4'], params['b4'])):
        C, wsz, _ = W.shape
        P = emb.shape[1] - wsz + 1
        acc = jnp.zeros((emb.shape[0], P, C), jnp.float32)
        for dw in range(wsz):
            acc = acc + jnp.einsum('bpe,ce->bpc', emb[:, dw:dw + P, :], W[:, dw, :])
        acc = jax.nn.relu(acc + b[None, :, :])
        feats.append(jnp.max(acc, axis=1))
    feat = jnp.concatenate(feats, axis=-1)
    logits = feat @ params['lin_w'].T + params['lin_b'][0]
    logp = jax.nn.log_softmax(logits, axis=-1)
    loss = -jnp.mean(jnp.take_along_axis(logp, input_labels[:, None], axis=-1))
    return loss, logits


# --------------------------- deterministic init -------------------------------
def init_params(key):
    ks = jax.random.split(key, 8)
    scale = jnp.sqrt(3.0 / EMB_DIM)              # self.scale in the module
    params = {
        'emb_table': jax.random.uniform(ks[0], (VOCAB, EMB_DIM), jnp.float32,
                                        minval=-scale, maxval=scale),
        'w2': 0.1 * jax.random.normal(ks[1], (OUT_CHANNELS, 2, EMB_DIM), jnp.float32),
        'b2': 0.01 * jax.random.normal(ks[2], (1, OUT_CHANNELS), jnp.float32),
        'w3': 0.1 * jax.random.normal(ks[3], (OUT_CHANNELS, 3, EMB_DIM), jnp.float32),
        'b3': 0.01 * jax.random.normal(ks[4], (1, OUT_CHANNELS), jnp.float32),
        'w4': 0.1 * jax.random.normal(ks[5], (OUT_CHANNELS, 4, EMB_DIM), jnp.float32),
        'b4': 0.01 * jax.random.normal(ks[6], (1, OUT_CHANNELS), jnp.float32),
        'lin_w': 0.1 * jax.random.normal(ks[7], (NUM_CLASSES,
                                                 OUT_CHANNELS * len(FILTERS)),
                                         jnp.float32),
        'lin_b': jnp.zeros((1, NUM_CLASSES), jnp.float32),
    }
    return params


if __name__ == "__main__":
    key = jax.random.PRNGKey(0)
    k_ids, k_labels, k_params = jax.random.split(key, 3)

    input_ids = jax.random.randint(k_ids, (BATCH, SEQ_LEN), 0, VOCAB, dtype=jnp.int32)
    input_labels = jax.random.randint(k_labels, (BATCH,), 0, NUM_CLASSES, dtype=jnp.int32)
    params = init_params(k_params)
    packed = jax.tree_util.tree_map(lambda x: x, pack_params(params))

    loss, logits = textcnn_forward(input_ids, input_labels, packed)
    jax.block_until_ready((loss, logits))

    ref_loss, ref_logits = textcnn_reference(input_ids, input_labels, params)
    assert jnp.allclose(logits, ref_logits, atol=1e-3, rtol=1e-3), "logits mismatch"
    assert jnp.allclose(loss, ref_loss, atol=1e-3, rtol=1e-3), "loss mismatch"

    print("KERNEL_OK")
</pallas_src>

<mosaic_0001>
module attributes {stable_mosaic.version = 11 : i64} {
  func.func @textcnn_kernel(%arg0: memref<32x1xi32, #tpu.memory_space<vmem>>, %arg1: memref<2x1xi32, #tpu.memory_space<vmem>>, %arg2: memref<50x32xf32, #tpu.memory_space<vmem>>, %arg3: memref<128x24xf32, #tpu.memory_space<vmem>>, %arg4: memref<1x24xf32, #tpu.memory_space<vmem>>, %arg5: memref<24x2xf32, #tpu.memory_space<vmem>>, %arg6: memref<1x2xf32, #tpu.memory_space<vmem>>, %arg7: memref<2x2xf32, #tpu.memory_space<vmem>>, %arg8: memref<1x1xf32, #tpu.memory_space<vmem>>) attributes {dimension_semantics = [], scalar_prefetch = 0 : i64, scratch_operands = 0 : i64, tpu.core_type = #tpu.core_type<tc>} {
    %c0 = arith.constant 0 : index
    %c0_0 = arith.constant 0 : index
    %0 = vector.load %arg0[%c0, %c0_0] : memref<32x1xi32, #tpu.memory_space<vmem>>, vector<32x1xi32>
    %1 = tpu.iota {dimensions = array<i32: 1>} : vector<32x50xi32>
    %2 = vector.broadcast %0 : vector<32x1xi32> to vector<32x50xi32>
    %3 = arith.cmpi eq, %1, %2 : vector<32x50xi32>
    %4 = arith.extui %3 : vector<32x50xi1> to vector<32x50xi32>
    %5 = arith.sitofp %4 : vector<32x50xi32> to vector<32x50xf32>
    %c0_1 = arith.constant 0 : index
    %c0_2 = arith.constant 0 : index
    %6 = vector.load %arg2[%c0_1, %c0_2] : memref<50x32xf32, #tpu.memory_space<vmem>>, vector<50x32xf32>
    %cst = arith.constant dense<0.000000e+00> : vector<32x32xf32>
    %7 = tpu.matmul %5, %6, %cst {dimension_numbers = #tpu.dot_dimension_numbers<[1], [0], [0], [1], [0, 0, 1, 1], [], []>} : vector<32x50xf32>, vector<50x32xf32>, vector<32x32xf32> -> vector<32x32xf32>
    %8 = vector.extract_strided_slice %7 {offsets = [1, 0], sizes = [31, 32], strides = [1, 1]} : vector<32x32xf32> to vector<31x32xf32>
    %cst_3 = arith.constant 0.000000e+00 : f32
    %9 = vector.broadcast %cst_3 : f32 to vector<1x32xf32>
    %10 = tpu.concatenate %8, %9 in 0 : vector<31x32xf32>, vector<1x32xf32> -> vector<32x32xf32>
    %11 = vector.extract_strided_slice %7 {offsets = [2, 0], sizes = [30, 32], strides = [1, 1]} : vector<32x32xf32> to vector<30x32xf32>
    %cst_4 = arith.constant 0.000000e+00 : f32
    %12 = vector.broadcast %cst_4 : f32 to vector<2x32xf32>
    %13 = tpu.concatenate %11, %12 in 0 : vector<30x32xf32>, vector<2x32xf32> -> vector<32x32xf32>
    %14 = vector.extract_strided_slice %7 {offsets = [3, 0], sizes = [29, 32], strides = [1, 1]} : vector<32x32xf32> to vector<29x32xf32>
    %cst_5 = arith.constant 0.000000e+00 : f32
    %15 = vector.broadcast %cst_5 : f32 to vector<3x32xf32>
    %16 = tpu.concatenate %14, %15 in 0 : vector<29x32xf32>, vector<3x32xf32> -> vector<32x32xf32>
    %17 = tpu.concatenate %7, %10, %13, %16 in 1 : vector<32x32xf32>, vector<32x32xf32>, vector<32x32xf32>, vector<32x32xf32> -> vector<32x128xf32>
    %c0_6 = arith.constant 0 : index
    %c0_7 = arith.constant 0 : index
    %18 = vector.load %arg3[%c0_6, %c0_7] : memref<128x24xf32, #tpu.memory_space<vmem>>, vector<128x24xf32>
    %cst_8 = arith.constant dense<0.000000e+00> : vector<32x24xf32>
    %19 = tpu.matmul %17, %18, %cst_8 {dimension_numbers = #tpu.dot_dimension_numbers<[1], [0], [0], [1], [0, 0, 1, 1], [], []>} : vector<32x128xf32>, vector<128x24xf32>, vector<32x24xf32> -> vector<32x24xf32>
    %c0_9 = arith.constant 0 : index
    %c0_10 = arith.constant 0 : index
    %20 = vector.load %arg4[%c0_9, %c0_10] : memref<1x24xf32, #tpu.memory_space<vmem>>, vector<1x24xf32>
    %21 = vector.broadcast %20 : vector<1x24xf32> to vector<32x24xf32>
    %22 = arith.addf %19, %21 : vector<32x24xf32>
    %cst_11 = arith.constant 0.000000e+00 : f32
    %23 = vector.broadcast %cst_11 : f32 to vector<32x24xf32>
    %24 = arith.maximumf %22, %23 : vector<32x24xf32>
    %25 = tpu.iota {dimensions = array<i32: 0>} : vector<16x24xi32>
    %26 = tpu.iota {dimensions = array<i32: 1>} : vector<16x24xi32>
    %c0_i32 = arith.constant 0 : i32
    %27 = vector.broadcast %c0_i32 : i32 to vector<16x24xi32>
    %28 = arith.cmpi sge, %26, %27 : vector<16x24xi32>
    %c8_i32 = arith.constant 8 : i32
    %29 = vector.broadcast %c8_i32 : i32 to vector<16x24xi32>
    %30 = arith.cmpi slt, %26, %29 : vector<16x24xi32>
    %31 = arith.andi %28, %30 : vector<16x24xi1>
    %c15_i32 = arith.constant 15 : i32
    %32 = vector.broadcast %c15_i32 : i32 to vector<16x24xi32>
    %33 = arith.cmpi slt, %25, %32 : vector<16x24xi32>
    %34 = arith.andi %31, %33 : vector<16x24xi1>
    %c8_i32_12 = arith.constant 8 : i32
    %35 = vector.broadcast %c8_i32_12 : i32 to vector<16x24xi32>
    %36 = arith.cmpi sge, %26, %35 : vector<16x24xi32>
    %c16_i32 = arith.constant 16 : i32
    %37 = vector.broadcast %c16_i32 : i32 to vector<16x24xi32>
    %38 = arith.cmpi slt, %26, %37 : vector<16x24xi32>
    %39 = arith.andi %36, %38 : vector<16x24xi1>
    %c14_i32 = arith.constant 14 : i32
    %40 = vector.broadcast %c14_i32 : i32 to vector<16x24xi32>
    %41 = arith.cmpi slt, %25, %40 : vector<16x24xi32>
    %42 = arith.andi %39, %41 : vector<16x24xi1>
    %43 = arith.ori %34, %42 : vector<16x24xi1>
    %c16_i32_13 = arith.constant 16 : i32
    %44 = vector.broadcast %c16_i32_13 : i32 to vector<16x24xi32>
    %45 = arith.cmpi sge, %26, %44 : vector<16x24xi32>
    %c24_i32 = arith.constant 24 : i32
    %46 = vector.broadcast %c24_i32 : i32 to vector<16x24xi32>
    %47 = arith.cmpi slt, %26, %46 : vector<16x24xi32>
    %48 = arith.andi %45, %47 : vector<16x24xi1>
    %c13_i32 = arith.constant 13 : i32
    %49 = vector.broadcast %c13_i32 : i32 to vector<16x24xi32>
    %50 = arith.cmpi slt, %25, %49 : vector<16x24xi32>
    %51 = arith.andi %48, %50 : vector<16x24xi1>
    %52 = arith.ori %43, %51 : vector<16x24xi1>
    %53 = vector.shape_cast %24 : vector<32x24xf32> to vector<2x16x24xf32>
    %54 = vector.shape_cast %52 : vector<16x24xi1> to vector<1x16x24xi1>
    %cst_14 = arith.constant 0.000000e+00 : f32
    %55 = vector.shape_cast %54 : vector<1x16x24xi1> to vector<1x16x24xi1>
    %56 = vector.broadcast %55 : vector<1x16x24xi1> to vector<2x16x24xi1>
    %57 = vector.broadcast %cst_14 : f32 to vector<2x16x24xf32>
    %58 = arith.select %56, %53, %57 : vector<2x16x24xi1>, vector<2x16x24xf32>
    %cst_15 = arith.constant dense<0xFF800000> : vector<2x24xf32>
    %59 = vector.multi_reduction <maximumf>, %58, %cst_15 [1] : vector<2x16x24xf32> to vector<2x24xf32>
    %c0_16 = arith.constant 0 : index
    %c0_17 = arith.constant 0 : index
    %60 = vector.load %arg5[%c0_16, %c0_17] : memref<24x2xf32, #tpu.memory_space<vmem>>, vector<24x2xf32>
    %cst_18 = arith.constant dense<0.000000e+00> : vector<2x2xf32>
    %61 = tpu.matmul %59, %60, %cst_18 {dimension_numbers = #tpu.dot_dimension_numbers<[1], [0], [0], [1], [0, 0, 1, 1], [], []>} : vector<2x24xf32>, vector<24x2xf32>, vector<2x2xf32> -> vector<2x2xf32>
    %c0_19 = arith.constant 0 : index
    %c0_20 = arith.constant 0 : index
    %62 = vector.load %arg6[%c0_19, %c0_20] : memref<1x2xf32, #tpu.memory_space<vmem>>, vector<1x2xf32>
    %63 = vector.broadcast %62 : vector<1x2xf32> to vector<2x2xf32>
    %64 = arith.addf %61, %63 : vector<2x2xf32>
    %c0_21 = arith.constant 0 : index
    %c0_22 = arith.constant 0 : index
    %65 = vector.load %arg7[%c0_21, %c0_22] : memref<2x2xf32, #tpu.memory_space<vmem>>, vector<2x2xf32>
    tpu.vector_store %arg7[%c0_21, %c0_22], %64 {strides = array<i32>} : memref<2x2xf32, #tpu.memory_space<vmem>>, vector<2x2xf32>,
    %66 = tpu.iota {dimensions = array<i32: 1>} : vector<2x2xi32>
    %c0_23 = arith.constant 0 : index
    %c0_24 = arith.constant 0 : index
    %67 = vector.load %arg1[%c0_23, %c0_24] : memref<2x1xi32, #tpu.memory_space<vmem>>, vector<2x1xi32>
    %68 = vector.broadcast %67 : vector<2x1xi32> to vector<2x2xi32>
    %69 = arith.cmpi eq, %66, %68 : vector<2x2xi32>
    %70 = arith.extui %69 : vector<2x2xi1> to vector<2x2xi32>
    %71 = arith.sitofp %70 : vector<2x2xi32> to vector<2x2xf32>
    %cst_25 = arith.constant dense<0xFF800000> : vector<2xf32>
    %72 = vector.multi_reduction <maximumf>, %64, %cst_25 [1] : vector<2x2xf32> to vector<2xf32>
    %73 = vector.shape_cast %72 : vector<2xf32> to vector<2x1xf32>
    %74 = vector.broadcast %73 : vector<2x1xf32> to vector<2x2xf32>
    %75 = arith.subf %64, %74 : vector<2x2xf32>
    %76 = math.exp %75 : vector<2x2xf32>
    %cst_26 = arith.constant dense<0.000000e+00> : vector<2xf32>
    %77 = vector.multi_reduction <add>, %76, %cst_26 [1] : vector<2x2xf32> to vector<2xf32>
    %78 = vector.shape_cast %77 : vector<2xf32> to vector<2x1xf32>
    %79 = math.log %78 : vector<2x1xf32>
    %80 = vector.broadcast %79 : vector<2x1xf32> to vector<2x2xf32>
    %81 = arith.subf %75, %80 : vector<2x2xf32>
    %82 = arith.mulf %71, %81 : vector<2x2xf32>
    %cst_27 = arith.constant dense<0.000000e+00> : vector<2xf32>
    %83 = vector.multi_reduction <add>, %82, %cst_27 [1] : vector<2x2xf32> to vector<2xf32>
    %84 = vector.shape_cast %83 : vector<2xf32> to vector<2x1xf32>
    %cst_28 = arith.constant 0.000000e+00 : f32
    %85 = vector.broadcast %cst_28 : f32 to vector<2x1xf32>
    %86 = arith.subf %85, %84 : vector<2x1xf32>
    %cst_29 = arith.constant dense<0.000000e+00> : vector<1xf32>
    %87 = vector.multi_reduction <add>, %86, %cst_29 [0] : vector<2x1xf32> to vector<1xf32>
    %88 = vector.shape_cast %87 : vector<1xf32> to vector<1x1xf32>
    %cst_30 = arith.constant 5.000000e-01 : f32
    %89 = vector.broadcast %cst_30 : f32 to vector<1x1xf32>
    %90 = arith.mulf %88, %89 : vector<1x1xf32>
    %c0_31 = arith.constant 0 : index
    %c0_32 = arith.constant 0 : index
    %91 = vector.load %arg8[%c0_31, %c0_32] : memref<1x1xf32, #tpu.memory_space<vmem>>, vector<1x1xf32>
    tpu.vector_store %arg8[%c0_31, %c0_32], %90 {strides = array<i32>} : memref<1x1xf32, #tpu.memory_space<vmem>>, vector<1x1xf32>,
    return
  }
}

</mosaic_0001>

<llo_original>
// kernel: textcnn_forward.1
$region0: #{textcnn_forward.1}
  #allocation0 [shape = 'u32[]', space=smem, size = 0x4, offset = 0x4, fixed_abs, tag = 'smem constant byte address 0x4 - core index']
  #allocation1 [shape = 'u32[144,128]{1,0:T(1,128)}', space=vmem, size = 0x12000, scoped, tag = 'internal scratch']
  %s0 = inlined_call_operand.vmem [shape: s32[32,1], index: 0, kind: input, shape index: {}]
  %s1 = inlined_call_operand.vmem [shape: s32[2,1], index: 1, kind: input, shape index: {}]
  %s2 = inlined_call_operand.vmem [shape: f32[50,32], index: 2, kind: input, shape index: {}]
  %s3 = inlined_call_operand.vmem [shape: f32[128,24], index: 3, kind: input, shape index: {}]
  %s4 = inlined_call_operand.vmem [shape: f32[1,24], index: 4, kind: input, shape index: {}]
  %s5 = inlined_call_operand.vmem [shape: f32[24,2], index: 5, kind: input, shape index: {}]
  %s6 = inlined_call_operand.vmem [shape: f32[1,2], index: 6, kind: input, shape index: {}]
  %s7 = inlined_call_operand.hbm [shape: f32[2,2], index: 7, kind: output, shape index: {0}]
  %s8 = inlined_call_operand.hbm [shape: f32[1,1], index: 8, kind: output, shape index: {1}]
  %9 = xla_tuple %s7, %s8
  %s10 = sld [smem:[#allocation0]]
  $region46: #{textcnn_forward.1} parent=0
    _
  %s12 = ssub.s32 1, %s10
  %s13 = scalar_select 0, %s12, %s10
  $region1: #{textcnn_forward.1} parent=0
    #allocation2 [shape = 'u8[1024]{0}', space=vmem, size = 0x400, scoped, tag = 'output window, operand 0, single buffered']
    #allocation3 [shape = 's32[1]{0}', space=sflag, size = 0x4, scoped, tag = 'scoped memory for textcnn_forward.1']
    #allocation4 [shape = 'u8[512]{0}', space=vmem, size = 0x400, scoped, tag = 'output window, operand 1, single buffered']
    #allocation5 [shape = 's32[1]{0}', space=sflag, size = 0x4, scoped, tag = 'scoped memory for textcnn_forward.1']
    %14 = vsyncpa [#allocation3], 0
    %15 = vsyncpa [#allocation5], 0
    // Predicated region
    $region2: #{textcnn_forward.1} parent=1 // pred_check
      _
    $region3: #{textcnn_forward.1} parent=1 // pred_check_branch
      %17 = sbr.rel (0) target = $region5
    $region4: #{textcnn_forward.1} parent=1 // pred_region
      _
    $region5: #{textcnn_forward.1} parent=1 // pred_fallthru
      _
    // Predicated region
    $region6: #{textcnn_forward.1} parent=1 // pred_check
      _
    $region7: #{textcnn_forward.1} parent=1 // pred_check_branch
      %19 = sbr.rel (0) target = $region9
    $region8: #{textcnn_forward.1} parent=1 // pred_region
      _
    $region9: #{textcnn_forward.1} parent=1 // pred_fallthru
      _
    // Predicated region
    $region10: #{textcnn_forward.1} parent=1 // pred_check
      _
    $region11: #{textcnn_forward.1} parent=1 // pred_check_branch
      %21 = sbr.rel (0) target = $region13
    $region12: #{textcnn_forward.1} parent=1 // pred_region
      _
    $region13: #{textcnn_forward.1} parent=1 // pred_fallthru
      _
    // Predicated region
    $region14: #{textcnn_forward.1} parent=1 // pred_check
      _
    $region15: #{textcnn_forward.1} parent=1 // pred_check_branch
      %23 = sbr.rel (0) target = $region17
    $region16: #{textcnn_forward.1} parent=1 // pred_region
      _
    $region17: #{textcnn_forward.1} parent=1 // pred_fallthru
      _
    // Predicated region
    $region18: #{textcnn_forward.1} parent=1 // pred_check
      _
    $region19: #{textcnn_forward.1} parent=1 // pred_check_branch
      %25 = sbr.rel (0) target = $region21
    $region20: #{textcnn_forward.1} parent=1 // pred_region
      _
    $region21: #{textcnn_forward.1} parent=1 // pred_fallthru
      _
    // Predicated region
    $region22: #{textcnn_forward.1} parent=1 // pred_check
      _
    $region23: #{textcnn_forward.1} parent=1 // pred_check_branch
      %27 = sbr.rel (0) target = $region25
    $region24: #{textcnn_forward.1} parent=1 // pred_region
      _
    $region25: #{textcnn_forward.1} parent=1 // pred_fallthru
      _
    // Predicated region
    $region26: #{textcnn_forward.1} parent=1 // pred_check
      _
    $region27: #{textcnn_forward.1} parent=1 // pred_check_branch
      %29 = sbr.rel (0) target = $region29
    $region28: #{textcnn_forward.1} parent=1 // pred_region
      _
    $region29: #{textcnn_forward.1} parent=1 // pred_fallthru
      _
    %v30 = vld [vmem:[%s0] sm:$0xff]
    %v31 = vld [vmem:[%s0 + $0x8] sm:$0xff]
    %v32 = vld [vmem:[%s0 + $0x10] sm:$0xff]
    %v33 = vld [vmem:[%s0 + $0x18] sm:$0xff]
    %v34 = vlaneseq
    %v35 = vand.u32 %v34, 127
    %36 = vset.pattern.permute.xlu0 0
    %37 = vperm.xlu0 %36, %v30
    %v38 = vpop.permute.xlu0 %37
    %39 = vset.pattern.permute.xlu0 0
    %40 = vperm.xlu0 %39, %v31
    %v41 = vpop.permute.xlu0 %40
    %42 = vset.pattern.permute.xlu0 0
    %43 = vperm.xlu0 %42, %v32
    %v44 = vpop.permute.xlu0 %43
    %45 = vset.pattern.permute.xlu0 0
    %46 = vperm.xlu0 %45, %v33
    %v47 = vpop.permute.xlu0 %46
    %vm48 = vcmp.eq.s32.totalorder %v35, %v38
    %vm49 = vcmp.eq.s32.totalorder %v35, %v41
    %vm50 = vcmp.eq.s32.totalorder %v35, %v44
    %vm51 = vcmp.eq.s32.totalorder %v35, %v47
    %v52 = vsel %vm48, 1, 0
    %v53 = vsel %vm49, 1, 0
    %v54 = vsel %vm50, 1, 0
    %v55 = vsel %vm51, 1, 0
    %v56 = vcvt.s32.f32 %v52
    %v57 = vcvt.s32.f32 %v53
    %v58 = vcvt.s32.f32 %v54
    %v59 = vcvt.s32.f32 %v55
    %v60 = vld [vmem:[%s2] sm:$0xff]
    %v61 = vld [vmem:[%s2 + $0x8] sm:$0xff]
    %v62 = vld [vmem:[%s2 + $0x10] sm:$0xff]
    %v63 = vld [vmem:[%s2 + $0x18] sm:$0xff]
    %v64 = vld [vmem:[%s2 + $0x20] sm:$0xff]
    %v65 = vld [vmem:[%s2 + $0x28] sm:$0xff]
    %v66 = vld [vmem:[%s2 + $0x30] sm:$0x3]
    %vm67 = vcmask 408576
    %v69 = vsel %vm67, %v56, 0
    %v72 = vsel %vm67, %v57, 0
    %v75 = vsel %vm67, %v58, 0
    %v78 = vsel %vm67, %v59, 0
    %vm80 = vcmask 1041408
    %v82 = vsel %vm80, %v66, 0
    %84 = vmatprep.subr.mxu0 0.0
    %85 = vmatpush1.msra.mxu0 %v60
    %86 = vmatprep.subr.mxu0 0.0
    %87 = vmatpush1.msra.mxu0 %v61
    %88 = vmatprep.subr.mxu0 0.0
    %89 = vmatpush1.msra.mxu0 %v62
    %90 = vmatprep.subr.mxu0 0.0
    %91 = vmatpush1.msra.mxu0 %v63
    %92 = vmatprep.subr.mxu0 0.0
    %93 = vmatpush1.msra.mxu0 %v64
    %94 = vmatprep.subr.mxu0 0.0
    %95 = vmatpush1.msra.mxu0 %v65
    %96 = vmatprep.subr.mxu0 0.0
    %97 = vmatpush1.msra.mxu0 %v82
    %98 = vmatprep.subr.mxu0 0.0
    %99 = vmatpush1.msra.mxu0 0.0
    %100 = vmatprep.subr.mxu0 0.0
    %101 = vmatpush1.msra.mxu0 0.0
    %102 = vmatprep.subr.mxu0 0.0
    %103 = vmatpush1.msra.mxu0 0.0
    %104 = vmatprep.subr.mxu0 0.0
    %105 = vmatpush1.msra.mxu0 0.0
    %106 = vmatprep.subr.mxu0 0.0
    %107 = vmatpush1.msra.mxu0 0.0
    %108 = vmatprep.subr.mxu0 0.0
    %109 = vmatpush1.msra.mxu0 0.0
    %110 = vmatprep.subr.mxu0 0.0
    %111 = vmatpush1.msra.mxu0 0.0
    %112 = vmatprep.subr.mxu0 0.0
    %113 = vmatpush1.msra.mxu0 0.0
    %114 = vmatprep.subr.mxu0 0.0
    %115 = vmatpush1.msra.mxu0 0.0
    %116 = vmatprep.subr.mxu0 0.0
    %117 = vmatpush1.msra.mxu0 0.0
    %118 = vmatprep.subr.mxu0 0.0
    %119 = vmatpush1.msra.mxu0 0.0
    %120 = vmatprep.subr.mxu0 0.0
    %121 = vmatpush1.msra.mxu0 0.0
    %122 = vmatprep.subr.mxu0 0.0
    %123 = vmatpush1.msra.mxu0 0.0
    %124 = vmatprep.subr.mxu0 0.0
    %125 = vmatpush1.msra.mxu0 0.0
    %126 = vmatprep.subr.mxu0 0.0
    %127 = vmatpush1.msra.mxu0 0.0
    %128 = vmatprep.subr.mxu0 0.0
    %129 = vmatpush1.msra.mxu0 0.0
    %130 = vmatprep.subr.mxu0 0.0
    %131 = vmatpush1.msra.mxu0 0.0
    %132 = vmatprep.subr.mxu0 0.0
    %133 = vmatpush1.msra.mxu0 0.0
    %134 = vmatprep.subr.mxu0 0.0
    %135 = vmatpush1.msra.mxu0 0.0
    %136 = vmatprep.subr.mxu0 0.0
    %137 = vmatpush1.msra.mxu0 0.0
    %138 = vmatprep.subr.mxu0 0.0
    %139 = vmatpush1.msra.mxu0 0.0
    %140 = vmatprep.subr.mxu0 0.0
    %141 = vmatpush1.msra.mxu0 0.0
    %142 = vmatprep.subr.mxu0 0.0
    %143 = vmatpush1.msra.mxu0 0.0
    %144 = vmatprep.subr.mxu0 0.0
    %145 = vmatpush1.msra.mxu0 0.0
    %146 = vmatprep.subr.mxu0 0.0
    %147 = vmatpush1.msra.mxu0 0.0
    %148 = vmatprep.mubr.f32.mxu0 0.0
    %149 = vmatmul.mubr.f32.gmra.mrb[0].mxu0 %v69
    %v150 = vpop.f32.mrb[0].mxu0
    %v151 = vadd.f32 0.0, %v150
    %v152 = vpop.f32.mrb[0].mxu0
    %153 = vmatprep.mubr.f32.mxu0 0.0
    %154 = vmatmul.mubr.f32.gmra.mrb[0].mxu0 %v72
    %v155 = vpop.f32.mrb[0].mxu0
    %v156 = vadd.f32 0.0, %v155
    %v157 = vpop.f32.mrb[0].mxu0
    %158 = vmatprep.mubr.f32.mxu0 0.0
    %159 = vmatmul.mubr.f32.gmra.mrb[0].mxu0 %v75
    %v160 = vpop.f32.mrb[0].mxu0
    %v161 = vadd.f32 0.0, %v160
    %v162 = vpop.f32.mrb[0].mxu0
    %163 = vmatprep.mubr.f32.mxu0 0.0
    %164 = vmatmul.mubr.f32.gmra.mrb[0].mxu0 %v78
    %v165 = vpop.f32.mrb[0].mxu0
    %v166 = vadd.f32 0.0, %v165
    %v167 = vpop.f32.mrb[0].mxu0
    %168 = vdwg.mxu0
    %vm173 = vcmask 1046528
    %v174 = vrot.slane %v151, 1
    %v175 = vrot.slane %v156, 1
    %v176 = vsel %vm173, %v174, %v175
    %v177 = vrot.slane %v161, 1
    %v178 = vsel %vm173, %v175, %v177
    %v179 = vrot.slane %v166, 1
    %v180 = vsel %vm173, %v177, %v179
    %v182 = vsel %vm173, %v179, 0.0
    %vm183 = vcmask 1045504
    %v184 = vrot.slane %v151, 2
    %v185 = vrot.slane %v156, 2
    %v186 = vsel %vm183, %v184, %v185
    %v187 = vrot.slane %v161, 2
    %v188 = vsel %vm183, %v185, %v187
    %v189 = vrot.slane %v166, 2
    %v190 = vsel %vm183, %v187, %v189
    %v192 = vsel %vm183, %v189, 0.0
    %vm193 = vcmask 1044480
    %v194 = vrot.slane %v151, 3
    %v195 = vrot.slane %v156, 3
    %v196 = vsel %vm193, %v194, %v195
    %v197 = vrot.slane %v161, 3
    %v198 = vsel %vm193, %v195, %v197
    %v199 = vrot.slane %v166, 3
    %v200 = vsel %vm193, %v197, %v199
    %v202 = vsel %vm193, %v199, 0.0
    %204 = vrot.lane.b32.xlu0 %v176, 32
    %v205 = vpop.permute.xlu0 %204
    %206 = vrot.lane.b32.xlu0 %v178, 32
    %v207 = vpop.permute.xlu0 %206
    %208 = vrot.lane.b32.xlu0 %v180, 32
    %v209 = vpop.permute.xlu0 %208
    %210 = vrot.lane.b32.xlu0 %v182, 32
    %v211 = vpop.permute.xlu0 %210
    %217 = vrot.lane.b32.xlu0 %v186, 64
    %v218 = vpop.permute.xlu0 %217
    %219 = vrot.lane.b32.xlu0 %v188, 64
    %v220 = vpop.permute.xlu0 %219
    %221 = vrot.lane.b32.xlu0 %v190, 64
    %v222 = vpop.permute.xlu0 %221
    %223 = vrot.lane.b32.xlu0 %v192, 64
    %v224 = vpop.permute.xlu0 %223
    %230 = vrot.lane.b32.xlu0 %v196, 96
    %v231 = vpop.permute.xlu0 %230
    %232 = vrot.lane.b32.xlu0 %v198, 96
    %v233 = vpop.permute.xlu0 %232
    %234 = vrot.lane.b32.xlu0 %v200, 96
    %v235 = vpop.permute.xlu0 %234
    %236 = vrot.lane.b32.xlu0 %v202, 96
    %v237 = vpop.permute.xlu0 %236
    %vm242 = vcmask 261120
    %v243 = vsel %vm242, %v151, %v205
    %v244 = vsel %vm242, %v156, %v207
    %v245 = vsel %vm242, %v161, %v209
    %v246 = vsel %vm242, %v166, %v211
    %vm247 = vcmask 523264
    %v248 = vsel %vm247, %v243, %v218
    %v249 = vsel %vm247, %v244, %v220
    %v250 = vsel %vm247, %v245, %v222
    %v251 = vsel %vm247, %v246, %v224
    %vm252 = vcmask 785408
    %v253 = vsel %vm252, %v248, %v231
    %v254 = vsel %vm252, %v249, %v233
    %v255 = vsel %vm252, %v250, %v235
    %v256 = vsel %vm252, %v251, %v237
    %v257 = vld [vmem:[%s3] sm:$0xff]
    %v258 = vld [vmem:[%s3 + $0x8] sm:$0xff]
    %v259 = vld [vmem:[%s3 + $0x10] sm:$0xff]
    %v260 = vld [vmem:[%s3 + $0x18] sm:$0xff]
    %v261 = vld [vmem:[%s3 + $0x20] sm:$0xff]
    %v262 = vld [vmem:[%s3 + $0x28] sm:$0xff]
    %v263 = vld [vmem:[%s3 + $0x30] sm:$0xff]
    %v264 = vld [vmem:[%s3 + $0x38] sm:$0xff]
    %v265 = vld [vmem:[%s3 + $0x40] sm:$0xff]
    %v266 = vld [vmem:[%s3 + $0x48] sm:$0xff]
    %v267 = vld [vmem:[%s3 + $0x50] sm:$0xff]
    %v268 = vld [vmem:[%s3 + $0x58] sm:$0xff]
    %v269 = vld [vmem:[%s3 + $0x60] sm:$0xff]
    %v270 = vld [vmem:[%s3 + $0x68] sm:$0xff]
    %v271 = vld [vmem:[%s3 + $0x70] sm:$0xff]
    %v272 = vld [vmem:[%s3 + $0x78] sm:$0xff]
    %v273 = vld [vmem:[%s4] sm:$0x1]
    %v275 = vlaneseq
    %v276 = vshrl.u32 %v275, 7
    %v277 = vsub.s32 0, %v276
    %v278 = vrot.slane %v273, %v277
    %280 = vmatprep.subr.mxu0 0.0
    %281 = vmatpush1.msra.mxu0 %v257
    %282 = vmatprep.subr.mxu0 0.0
    %283 = vmatpush1.msra.mxu0 %v258
    %284 = vmatprep.subr.mxu0 0.0
    %285 = vmatpush1.msra.mxu0 %v259
    %286 = vmatprep.subr.mxu0 0.0
    %287 = vmatpush1.msra.mxu0 %v260
    %288 = vmatprep.subr.mxu0 0.0
    %289 = vmatpush1.msra.mxu0 %v261
    %290 = vmatprep.subr.mxu0 0.0
    %291 = vmatpush1.msra.mxu0 %v262
    %292 = vmatprep.subr.mxu0 0.0
    %293 = vmatpush1.msra.mxu0 %v263
    %294 = vmatprep.subr.mxu0 0.0
    %295 = vmatpush1.msra.mxu0 %v264
    %296 = vmatprep.subr.mxu0 0.0
    %297 = vmatpush1.msra.mxu0 %v265
    %298 = vmatprep.subr.mxu0 0.0
    %299 = vmatpush1.msra.mxu0 %v266
    %300 = vmatprep.subr.mxu0 0.0
    %301 = vmatpush1.msra.mxu0 %v267
    %302 = vmatprep.subr.mxu0 0.0
    %303 = vmatpush1.msra.mxu0 %v268
    %304 = vmatprep.subr.mxu0 0.0
    %305 = vmatpush1.msra.mxu0 %v269
    %306 = vmatprep.subr.mxu0 0.0
    %307 = vmatpush1.msra.mxu0 %v270
    %308 = vmatprep.subr.mxu0 0.0
    %309 = vmatpush1.msra.mxu0 %v271
    %310 = vmatprep.subr.mxu0 0.0
    %311 = vmatpush1.msra.mxu0 %v272
    %312 = vmatprep.subr.mxu0 0.0
    %313 = vmatpush1.msra.mxu0 0.0
    %314 = vmatprep.subr.mxu0 0.0
    %315 = vmatpush1.msra.mxu0 0.0
    %316 = vmatprep.subr.mxu0 0.0
    %317 = vmatpush1.msra.mxu0 0.0
    %318 = vmatprep.subr.mxu0 0.0
    %319 = vmatpush1.msra.mxu0 0.0
    %320 = vmatprep.subr.mxu0 0.0
    %321 = vmatpush1.msra.mxu0 0.0
    %322 = vmatprep.subr.mxu0 0.0
    %323 = vmatpush1.msra.mxu0 0.0
    %324 = vmatprep.subr.mxu0 0.0
    %325 = vmatpush1.msra.mxu0 0.0
    %326 = vmatprep.subr.mxu0 0.0
    %327 = vmatpush1.msra.mxu0 0.0
    %328 = vmatprep.subr.mxu0 0.0
    %329 = vmatpush1.msra.mxu0 0.0
    %330 = vmatprep.subr.mxu0 0.0
    %331 = vmatpush1.msra.mxu0 0.0
    %332 = vmatprep.subr.mxu0 0.0
    %333 = vmatpush1.msra.mxu0 0.0
    %334 = vmatprep.subr.mxu0 0.0
    %335 = vmatpush1.msra.mxu0 0.0
    %336 = vmatprep.subr.mxu0 0.0
    %337 = vmatpush1.msra.mxu0 0.0
    %338 = vmatprep.subr.mxu0 0.0
    %339 = vmatpush1.msra.mxu0 0.0
    %340 = vmatprep.subr.mxu0 0.0
    %341 = vmatpush1.msra.mxu0 0.0
    %342 = vmatprep.subr.mxu0 0.0
    %343 = vmatpush1.msra.mxu0 0.0
    %344 = vmatprep.mubr.f32.mxu0 0.0
    %345 = vmatmul.mubr.f32.gmra.mrb[0].mxu0 %v253
    %v346 = vpop.f32.mrb[0].mxu0
    %v347 = vadd.f32 %v278, %v346
    %v348 = vpop.f32.mrb[0].mxu0
    %349 = vmatprep.mubr.f32.mxu0 0.0
    %350 = vmatmul.mubr.f32.gmra.mrb[0].mxu0 %v254
    %v351 = vpop.f32.mrb[0].mxu0
    %v352 = vadd.f32 %v278, %v351
    %v353 = vpop.f32.mrb[0].mxu0
    %354 = vmatprep.mubr.f32.mxu0 0.0
    %355 = vmatmul.mubr.f32.gmra.mrb[0].mxu0 %v255
    %v356 = vpop.f32.mrb[0].mxu0
    %v357 = vadd.f32 %v278, %v356
    %v358 = vpop.f32.mrb[0].mxu0
    %359 = vmatprep.mubr.f32.mxu0 0.0
    %360 = vmatmul.mubr.f32.gmra.mrb[0].mxu0 %v256
    %v361 = vpop.f32.mrb[0].mxu0
    %v362 = vadd.f32 %v278, %v361
    %v363 = vpop.f32.mrb[0].mxu0
    %364 = vdwg.mxu0
    %v365 = vmax.f32 %v347, 0.0
    %v366 = vmax.f32 %v352, 0.0
    %v367 = vmax.f32 %v357, 0.0
    %v368 = vmax.f32 %v362, 0.0
    %v369 = vlaneseq
    %v370 = vshrl.u32 %v369, 7
    %v371 = vadd.s32 %v370, 8
    %vm372 = vcmp.ge.s32.totalorder %v35, 0
    %vm373 = vcmp.lt.s32.totalorder %v35, 8
    %vm374 = vmand %vm372, %vm373
    %vm375 = vcmp.lt.s32.totalorder %v370, 15
    %vm376 = vcmp.lt.s32.totalorder %v371, 15
    %vm377 = vmand %vm374, %vm375
    %vm378 = vmand %vm374, %vm376
    %vm379 = vcmp.ge.s32.totalorder %v35, 8
    %vm380 = vcmp.lt.s32.totalorder %v35, 16
    %vm381 = vmand %vm379, %vm380
    %vm382 = vcmp.lt.s32.totalorder %v370, 14
    %vm383 = vcmp.lt.s32.totalorder %v371, 14
    %vm384 = vmand %vm381, %vm382
    %vm385 = vmand %vm381, %vm383
    %vm386 = vmor %vm377, %vm384
    %vm387 = vmor %vm378, %vm385
    %vm388 = vcmp.ge.s32.totalorder %v35, 16
    %vm389 = vcmp.lt.s32.totalorder %v35, 24
    %vm390 = vmand %vm388, %vm389
    %vm391 = vcmp.lt.s32.totalorder %v370, 13
    %vm392 = vcmp.lt.s32.totalorder %v371, 13
    %vm393 = vmand %vm390, %vm391
    %vm394 = vmand %vm390, %vm392
    %vm395 = vmor %vm386, %vm393
    %vm396 = vmor %vm387, %vm394
    %v397 = vsel %vm395, 1, 0
    %v398 = vsel %vm396, 1, 0
    %vm399 = vcmp.eq.s32.totalorder %v397, 1
    %vm400 = vcmp.eq.s32.totalorder %v398, 1
    %v401 = vsel %vm399, %v365, 0.0
    %v402 = vsel %vm400, %v366, 0.0
    %v403 = vsel %vm399, %v367, 0.0
    %v404 = vsel %vm400, %v368, 0.0
    %vm405 = vcmask 195584
    %v406 = vsel %vm405, %v401, -inf
    %v407 = vsel %vm405, %v402, -inf
    %v408 = vmax.f32 %v406, %v407
    %v409 = vrot.slane %v408, 4
    %v410 = vmax.f32 %v408, %v409
    %v411 = vrot.slane %v410, 2
    %v412 = vmax.f32 %v410, %v411
    %v413 = vrot.slane %v412, 1
    %v414 = vmax.f32 %v412, %v413
    %v415 = vsel %vm405, %v403, -inf
    %v416 = vsel %vm405, %v404, -inf
    %v417 = vmax.f32 %v415, %v416
    %v418 = vrot.slane %v417, 4
    %v419 = vmax.f32 %v417, %v418
    %v420 = vrot.slane %v419, 2
    %v421 = vmax.f32 %v419, %v420
    %v422 = vrot.slane %v421, 1
    %v423 = vmax.f32 %v421, %v422
    %v424 = vld [vmem:[%s5] sm:$0xff]
    %v425 = vld [vmem:[%s5 + $0x8] sm:$0xff]
    %v426 = vld [vmem:[%s5 + $0x10] sm:$0xff]
    %v427 = vld [vmem:[%s6] sm:$0x1]
    %v429 = vlaneseq
    %v430 = vshrl.u32 %v429, 7
    %v431 = vsub.s32 0, %v430
    %v432 = vrot.slane %v427, %v431
    %vm436 = vcmask 1041409
    %v437 = vsel %vm436, %v423, %v414
    %v438 = vsel %vm405, %v437, 0
    %440 = vmatprep.subr.mxu0 0.0
    %441 = vmatpush1.msra.mxu0 %v424
    %442 = vmatprep.subr.mxu0 0.0
    %443 = vmatpush1.msra.mxu0 %v425
    %444 = vmatprep.subr.mxu0 0.0
    %445 = vmatpush1.msra.mxu0 %v426
    %446 = vmatprep.subr.mxu0 0.0
    %447 = vmatpush1.msra.mxu0 0.0
    %448 = vmatprep.subr.mxu0 0.0
    %449 = vmatpush1.msra.mxu0 0.0
    %450 = vmatprep.subr.mxu0 0.0
    %451 = vmatpush1.msra.mxu0 0.0
    %452 = vmatprep.subr.mxu0 0.0
    %453 = vmatpush1.msra.mxu0 0.0
    %454 = vmatprep.subr.mxu0 0.0
    %455 = vmatpush1.msra.mxu0 0.0
    %456 = vmatprep.subr.mxu0 0.0
    %457 = vmatpush1.msra.mxu0 0.0
    %458 = vmatprep.subr.mxu0 0.0
    %459 = vmatpush1.msra.mxu0 0.0
    %460 = vmatprep.subr.mxu0 0.0
    %461 = vmatpush1.msra.mxu0 0.0
    %462 = vmatprep.subr.mxu0 0.0
    %463 = vmatpush1.msra.mxu0 0.0
    %464 = vmatprep.subr.mxu0 0.0
    %465 = vmatpush1.msra.mxu0 0.0
    %466 = vmatprep.subr.mxu0 0.0
    %467 = vmatpush1.msra.mxu0 0.0
    %468 = vmatprep.subr.mxu0 0.0
    %469 = vmatpush1.msra.mxu0 0.0
    %470 = vmatprep.subr.mxu0 0.0
    %471 = vmatpush1.msra.mxu0 0.0
    %472 = vmatprep.subr.mxu0 0.0
    %473 = vmatpush1.msra.mxu0 0.0
    %474 = vmatprep.subr.mxu0 0.0
    %475 = vmatpush1.msra.mxu0 0.0
    %476 = vmatprep.subr.mxu0 0.0
    %477 = vmatpush1.msra.mxu0 0.0
    %478 = vmatprep.subr.mxu0 0.0
    %479 = vmatpush1.msra.mxu0 0.0
    %480 = vmatprep.subr.mxu0 0.0
    %481 = vmatpush1.msra.mxu0 0.0
    %482 = vmatprep.subr.mxu0 0.0
    %483 = vmatpush1.msra.mxu0 0.0
    %484 = vmatprep.subr.mxu0 0.0
    %485 = vmatpush1.msra.mxu0 0.0
    %486 = vmatprep.subr.mxu0 0.0
    %487 = vmatpush1.msra.mxu0 0.0
    %488 = vmatprep.subr.mxu0 0.0
    %489 = vmatpush1.msra.mxu0 0.0
    %490 = vmatprep.subr.mxu0 0.0
    %491 = vmatpush1.msra.mxu0 0.0
    %492 = vmatprep.subr.mxu0 0.0
    %493 = vmatpush1.msra.mxu0 0.0
    %494 = vmatprep.subr.mxu0 0.0
    %495 = vmatpush1.msra.mxu0 0.0
    %496 = vmatprep.subr.mxu0 0.0
    %497 = vmatpush1.msra.mxu0 0.0
    %498 = vmatprep.subr.mxu0 0.0
    %499 = vmatpush1.msra.mxu0 0.0
    %500 = vmatprep.subr.mxu0 0.0
    %501 = vmatpush1.msra.mxu0 0.0
    %502 = vmatprep.subr.mxu0 0.0
    %503 = vmatpush1.msra.mxu0 0.0
    %504 = vmatprep.mubr.f32.mxu0 0.0
    %505 = vmatmul.mubr.f32.gmra.mrb[0].mxu0 %v438
    %v506 = vpop.f32.mrb[0].mxu0
    %v507 = vadd.f32 %v432, %v506
    %v508 = vpop.f32.mrb[0].mxu0
    %509 = vdwg.mxu0
    %vm510 = vcmask 9216
    %511 = vst.msk [vmem:[#allocation2] sm:$0x3] %vm510, %v507
    %v512 = vld [vmem:[%s1] sm:$0x3]
    %513 = vset.pattern.permute.xlu0 0
    %514 = vperm.xlu0 %513, %v512
    %v515 = vpop.permute.xlu0 %514
    %vm516 = vcmp.eq.s32.totalorder %v35, %v515
    %v517 = vsel %vm516, 1, 0
    %v518 = vcvt.s32.f32 %v517
    %v519 = vsel %vm510, %v507, -inf
    %520 = vmax.xlane.f32.xlu0 %v519
    %v521 = vpop.xlane.xlu0 %520
    %v522 = vsub.f32 %v507, %v521
    %v523 = vmul.f32 %v522, 1.442695
    %v524 = vpow.pop %v523
    %v525 = vsel %vm510, %v524, 0.0
    %526 = vadd.xlane.f32.xlu0 %v525
    %v527 = vpop.xlane.xlu0 %526
    %v528 = vlog2.pop %v527
    %v529 = vmul.f32 %v528, 0.6931472
    %v530 = vsub.f32 %v522, %v529
    %v531 = vmul.f32 %v518, %v530
    %v532 = vsel %vm510, %v531, 0.0
    %533 = vadd.xlane.f32.xlu0 %v532
    %v534 = vpop.xlane.xlu0 %533
    %v535 = vsub.f32 0.0, %v534
    %v536 = vsel %vm80, %v535, 0.0
    %v537 = vrot.slane %v536, 4
    %v538 = vadd.f32 %v536, %v537
    %v539 = vrot.slane %v538, 2
    %v540 = vadd.f32 %v538, %v539
    %v541 = vrot.slane %v540, 1
    %v542 = vadd.f32 %v540, %v541
    %v543 = vmul.f32 %v542, 0.5
    %vm544 = vcmask 0
    %545 = vst.msk [vmem:[#allocation4] sm:$0x1] %vm544, %v543
    // Predicated region
    $region30: #{textcnn_forward.1} parent=1 // pred_check
      _
    $region31: #{textcnn_forward.1} parent=1 // pred_check_branch
      %547 = sbr.rel (0) target = $region33
    $region32: #{textcnn_forward.1} parent=1 // pred_region
      %s549 = ssub.s32 32, 32
      %550 = vsyncadd [#allocation3], %s549
      %s552 = sshll.u32 [#allocation2], 4
      %s553 = int_to_ptr.vmem [resolvable:$true] %s552
      %555 = dma.vmem_to_hbm [thread:$0]  %s553, 32, %s7, [#allocation3]
    $region33: #{textcnn_forward.1} parent=1 // pred_fallthru
      _
    // Predicated region
    $region34: #{textcnn_forward.1} parent=1 // pred_check
      _
    $region35: #{textcnn_forward.1} parent=1 // pred_check_branch
      %557 = sbr.rel (0) target = $region37
    $region36: #{textcnn_forward.1} parent=1 // pred_region
      %s559 = ssub.s32 16, 16
      %560 = vsyncadd [#allocation5], %s559
      %s562 = sshll.u32 [#allocation4], 4
      %s563 = int_to_ptr.vmem [resolvable:$true] %s562
      %565 = dma.vmem_to_hbm [thread:$0]  %s563, 16, %s8, [#allocation5]
    $region37: #{textcnn_forward.1} parent=1 // pred_fallthru
      _
    // Predicated region
    $region38: #{textcnn_forward.1} parent=1 // pred_check
      _
    $region39: #{textcnn_forward.1} parent=1 // pred_check_branch
      %567 = sbr.rel (0) target = $region41
    $region40: #{textcnn_forward.1} parent=1 // pred_region
      %568 = dma.done [#allocation3], 32
    $region41: #{textcnn_forward.1} parent=1 // pred_fallthru
      _
    // Predicated region
    $region42: #{textcnn_forward.1} parent=1 // pred_check
      _
    $region43: #{textcnn_forward.1} parent=1 // pred_check_branch
      %570 = sbr.rel (0) target = $region45
    $region44: #{textcnn_forward.1} parent=1 // pred_region
      %571 = dma.done [#allocation5], 16
    $region45: #{textcnn_forward.1} parent=1 // pred_fallthru
      _
    %572 = vsyncpa [#allocation3], 1
    %573 = vsyncpa [#allocation5], 1

</llo_original>
